<compile_context>
chip_gen: v7x
topology: tpu7x:2x2x1
jax: 0.10.0
libtpu: 0.0.40
codegen_flags: <defaults>
</compile_context>

<pallas_src>
import functools
import math

import jax
import jax.numpy as jnp
from jax import lax
from jax.experimental import pallas as pl
from jax.experimental.pallas import tpu as pltpu


def _round_up(x, m):
    return (x + m - 1) // m * m


def _choose_tile(n_rows, block_rows):
    """Pick (tile_rows, padded_rows): big tiles, low pad waste, even #steps if cheap."""
    n8 = _round_up(max(n_rows, 1), 8)
    tm = max(8, min(_round_up(block_rows, 8), n8))
    # Shrink the tile while row padding would waste more than ~12.5% of the HBM
    # traffic (and of the grid work).
    while tm > 8 and (_round_up(n8, tm) - n8) * 8 > n8:
        tm = max(8, _round_up(tm // 2, 8))
    n_pad = _round_up(n8, tm)
    # Megacore friendliness (v7x has 2 TensorCores): for large tiles prefer an even
    # number of grid steps so the "parallel" axis splits evenly across cores.
    steps = n_pad // tm
    if steps % 2 == 1 and tm >= 512:
        tm = max(8, _round_up(tm // 2, 8))
        n_pad = _round_up(n8, tm)
    return tm, n_pad


def _attn_kernel(q_ref, k_ref, v_ref, bsum_ref, o_ref, *,
                 num_heads, head_dim, scale, causal):
    H, D = num_heads, head_dim
    HD = H * D

    q = q_ref[...].astype(jnp.float32) * scale     # (TM, HD); scale folded into q
    k = k_ref[...].astype(jnp.float32)
    v = v_ref[...].astype(jnp.float32)
    bsum2 = bsum_ref[...]                          # (2*HD, HD) bf16 constant, resident

    # Per-offset additive causal masks, built from the head id of each lane using the
    # SAME roll primitive as k/v, so the mask stays consistent with whatever rotation
    # direction pltpu.roll implements.  ~One vreg of work per offset.
    masks = None
    if causal:
        blk = lax.broadcasted_iota(jnp.int32, (8, HD), 1) // D
        masks = []
        for r in range(H):
            j_blk = blk if r == 0 else pltpu.roll(blk, shift=r * D, axis=1)
            masks.append(jnp.where(j_blk[:1] > blk[:1],
                                   jnp.float32(-1e30), jnp.float32(0.0)))

    # Pass 1: scores per relative head offset r (block-broadcast over the D lanes of
    # each query head), fused with the running row max.  The f32 product is split into
    # explicit bf16 hi/lo halves and contracted in one 256-deep MXU pass against the
    # constant 0/1 block-sum matrix, keeping ~f32 accuracy at bf16 matmul cost.
    s_list = []
    m = None
    for r in range(H):
        kr = k if r == 0 else pltpu.roll(k, shift=r * D, axis=1)
        prod = q * kr
        hi = prod.astype(jnp.bfloat16)
        lo = (prod - hi.astype(jnp.float32)).astype(jnp.bfloat16)
        x2 = jnp.concatenate([hi, lo], axis=1)                   # (TM, 2*HD) bf16
        s = jnp.dot(x2, bsum2, preferred_element_type=jnp.float32)
        if causal and r > 0:                                     # r == 0 is j == i
            s = s + masks[r]                                     # (1, HD) broadcast add
        s_list.append(s)
        m = s if m is None else jnp.maximum(m, s)

    # Pass 2: numerically-stable softmax over the H offsets (== over key heads), fused
    # with the weighted sum of the identically-rolled values.
    den = jnp.zeros_like(m)
    acc = jnp.zeros_like(q)
    for r in range(H):
        p = jnp.exp(s_list[r] - m)
        den = den + p
        vr = v if r == 0 else pltpu.roll(v, shift=r * D, axis=1)
        acc = acc + p * vr

    # EUP approximate reciprocal + one Newton step (den >= 1, well conditioned).
    r0 = pl.reciprocal(den, approx=True)
    inv = r0 * (2.0 - den * r0)
    o_ref[...] = (acc * inv).astype(o_ref.dtype)


def traditional_attention(q, k, v, scale=None, causal=False, block_rows=1024):
    """Pallas implementation of TraditionalAttention.forward.

    q, k, v: [batch, seq_len, num_heads, head_dim] -> same-shape output.
    Inputs may be f32 or bf16; arithmetic is done in f32 inside the kernel.
    """
    B, S, H, D = q.shape
    if scale is None:
        scale = 1.0 / math.sqrt(D)
    N = B * S
    HD = H * D

    # Lane-dense flat layout: one row of H*D (=128 here) lanes per (batch, seq) pos.
    qf = q.reshape(N, HD)
    kf = k.reshape(N, HD)
    vf = v.reshape(N, HD)

    tm, n_pad = _choose_tile(N, block_rows)
    if n_pad != N:
        pad = ((0, n_pad - N), (0, 0))
        qf = jnp.pad(qf, pad)
        kf = jnp.pad(kf, pad)
        vf = jnp.pad(vf, pad)

    # Constant 0/1 block-sum matrix, stacked twice for the hi/lo bf16 operand (0/1 is
    # exact in bf16); passed once with a constant index_map, resident across steps.
    rows = jnp.arange(2 * HD) % HD
    cols = jnp.arange(HD)
    bsum2 = ((rows[:, None] // D) == (cols[None, :] // D)).astype(jnp.bfloat16)

    kernel = functools.partial(
        _attn_kernel, num_heads=H, head_dim=D, scale=float(scale),
        causal=bool(causal))

    row_spec = pl.BlockSpec((tm, HD), lambda i: (i, 0))
    const_spec = pl.BlockSpec((2 * HD, HD), lambda i: (0, 0))
    out = pl.pallas_call(
        kernel,
        out_shape=jax.ShapeDtypeStruct((n_pad, HD), q.dtype),
        grid_spec=pltpu.PrefetchScalarGridSpec(
            num_scalar_prefetch=0,
            grid=(n_pad // tm,),
            in_specs=[row_spec, row_spec, row_spec, const_spec],
            out_specs=row_spec,
        ),
        compiler_params=pltpu.CompilerParams(
            dimension_semantics=("parallel",),
            vmem_limit_bytes=32 * 1024 * 1024,   # ~12 MiB actual footprint at tm=1024
        ),
    )(qf, kf, vf, bsum2)
    return out[:N].reshape(B, S, H, D)


def _reference(q, k, v, scale=None, causal=False):
    """Pure-JAX reference mirroring the PyTorch module (full f32 matmul precision)."""
    B, S, H, D = q.shape
    if scale is None:
        scale = 1.0 / math.sqrt(D)
    hp = lax.Precision.HIGHEST
    scores = jnp.einsum("bshd,bsgd->bshg", q, k, precision=hp) * scale
    if causal:
        mask = jnp.triu(jnp.ones((H, H), dtype=bool), k=1)
        scores = jnp.where(mask[None, None, :, :], -jnp.inf, scores)
    w = jax.nn.softmax(scores, axis=-1)
    return jnp.einsum("bshg,bsgd->bshd", w, v, precision=hp)


if __name__ == "__main__":
    batch, seq_len, num_heads, head_dim = 2, 8, 4, 32

    root = jax.random.PRNGKey(0)
    kq, kk, kv, key2 = jax.random.split(root, 4)
    q = jax.random.normal(kq, (batch, seq_len, num_heads, head_dim), dtype=jnp.float32)
    k = jax.random.normal(kk, (batch, seq_len, num_heads, head_dim), dtype=jnp.float32)
    v = jax.random.normal(kv, (batch, seq_len, num_heads, head_dim), dtype=jnp.float32)

    # TraditionalAttention(head_dim=32) defaults: scale=1/sqrt(head_dim), causal=False.
    out = jax.block_until_ready(traditional_attention(q, k, v))
    ref = _reference(q, k, v)
    assert out.shape == (batch, seq_len, num_heads, head_dim)
    assert jnp.allclose(out, ref, atol=1e-4, rtol=1e-4), "mismatch vs reference (non-causal)"

    # Causal variant (masking over the heads axis, as F.scaled_dot_product_attention
    # does for the module's 4-D inputs).
    out_c = jax.block_until_ready(traditional_attention(q, k, v, causal=True))
    ref_c = _reference(q, k, v, causal=True)
    assert jnp.allclose(out_c, ref_c, atol=1e-4, rtol=1e-4), "mismatch vs reference (causal)"

    # Larger run exercising the adaptive tile choice, multi-step grid and row padding:
    # N = 1200 -> tm = 256, padded to 1280 (5 grid steps, ~6.7% pad waste).
    kq2, kk2, kv2 = jax.random.split(key2, 3)
    shape2 = (2, 600, num_heads, head_dim)
    q2 = jax.random.normal(kq2, shape2, dtype=jnp.float32)
    k2 = jax.random.normal(kk2, shape2, dtype=jnp.float32)
    v2 = jax.random.normal(kv2, shape2, dtype=jnp.float32)
    out2 = jax.block_until_ready(traditional_attention(q2, k2, v2))
    ref2 = _reference(q2, k2, v2)
    assert jnp.allclose(out2, ref2, atol=1e-4, rtol=1e-4), "mismatch vs reference (tiled)"

    print("KERNEL_OK")
</pallas_src>

<mosaic_0001>
module attributes {stable_mosaic.version = 11 : i64} {
  func.func @_attn_kernel(%arg0: i32, %arg1: memref<16x128xf32, #tpu.memory_space<vmem>>, %arg2: memref<16x128xf32, #tpu.memory_space<vmem>>, %arg3: memref<16x128xf32, #tpu.memory_space<vmem>>, %arg4: memref<256x128xbf16, #tpu.memory_space<vmem>>, %arg5: memref<16x128xf32, #tpu.memory_space<vmem>>) attributes {dimension_semantics = [#tpu.dimension_semantics<parallel>], iteration_bounds = array<i64: 1>, scalar_prefetch = 0 : i64, scratch_operands = 0 : i64, tpu.core_type = #tpu.core_type<tc>, window_params = [{transform_indices = @transform_0, window_bounds = array<i64: 16, 128>}, {transform_indices = @transform_1, window_bounds = array<i64: 16, 128>}, {transform_indices = @transform_2, window_bounds = array<i64: 16, 128>}, {pipeline_mode = #tpu.pipeline_mode<synchronous>, transform_indices = @transform_3, window_bounds = array<i64: 256, 128>}, {transform_indices = @transform_4, window_bounds = array<i64: 16, 128>}]} {
    %c0 = arith.constant 0 : index
    %c0_0 = arith.constant 0 : index
    %0 = vector.load %arg1[%c0, %c0_0] : memref<16x128xf32, #tpu.memory_space<vmem>>, vector<16x128xf32>
    %cst = arith.constant 0.176776692 : f32
    %1 = vector.broadcast %cst : f32 to vector<16x128xf32>
    %2 = arith.mulf %0, %1 : vector<16x128xf32>
    %c0_1 = arith.constant 0 : index
    %c0_2 = arith.constant 0 : index
    %3 = vector.load %arg2[%c0_1, %c0_2] : memref<16x128xf32, #tpu.memory_space<vmem>>, vector<16x128xf32>
    %c0_3 = arith.constant 0 : index
    %c0_4 = arith.constant 0 : index
    %4 = vector.load %arg3[%c0_3, %c0_4] : memref<16x128xf32, #tpu.memory_space<vmem>>, vector<16x128xf32>
    %c0_5 = arith.constant 0 : index
    %c0_6 = arith.constant 0 : index
    %5 = vector.load %arg4[%c0_5, %c0_6] : memref<256x128xbf16, #tpu.memory_space<vmem>>, vector<256x128xbf16>
    %6 = arith.mulf %2, %3 : vector<16x128xf32>
    %7 = arith.truncf %6 : vector<16x128xf32> to vector<16x128xbf16>
    %8 = arith.extf %7 : vector<16x128xbf16> to vector<16x128xf32>
    %9 = arith.subf %6, %8 : vector<16x128xf32>
    %10 = arith.truncf %9 : vector<16x128xf32> to vector<16x128xbf16>
    %11 = tpu.concatenate %7, %10 in 1 : vector<16x128xbf16>, vector<16x128xbf16> -> vector<16x256xbf16>
    %cst_7 = arith.constant dense<0.000000e+00> : vector<16x128xf32>
    %12 = tpu.matmul %11, %5, %cst_7 {dimension_numbers = #tpu.dot_dimension_numbers<[1], [0], [0], [1], [0, 0, 1, 1], [], []>} : vector<16x256xbf16>, vector<256x128xbf16>, vector<16x128xf32> -> vector<16x128xf32>
    %c32_i32 = arith.constant 32 : i32
    %13 = tpu.dynamic_rotate %3 by %c32_i32 dim 1 : vector<16x128xf32>, i32 -> vector<16x128xf32>
    %14 = arith.mulf %2, %13 : vector<16x128xf32>
    %15 = arith.truncf %14 : vector<16x128xf32> to vector<16x128xbf16>
    %16 = arith.extf %15 : vector<16x128xbf16> to vector<16x128xf32>
    %17 = arith.subf %14, %16 : vector<16x128xf32>
    %18 = arith.truncf %17 : vector<16x128xf32> to vector<16x128xbf16>
    %19 = tpu.concatenate %15, %18 in 1 : vector<16x128xbf16>, vector<16x128xbf16> -> vector<16x256xbf16>
    %cst_8 = arith.constant dense<0.000000e+00> : vector<16x128xf32>
    %20 = tpu.matmul %19, %5, %cst_8 {dimension_numbers = #tpu.dot_dimension_numbers<[1], [0], [0], [1], [0, 0, 1, 1], [], []>} : vector<16x256xbf16>, vector<256x128xbf16>, vector<16x128xf32> -> vector<16x128xf32>
    %21 = arith.maximumf %12, %20 : vector<16x128xf32>
    %c64_i32 = arith.constant 64 : i32
    %22 = tpu.dynamic_rotate %3 by %c64_i32 dim 1 : vector<16x128xf32>, i32 -> vector<16x128xf32>
    %23 = arith.mulf %2, %22 : vector<16x128xf32>
    %24 = arith.truncf %23 : vector<16x128xf32> to vector<16x128xbf16>
    %25 = arith.extf %24 : vector<16x128xbf16> to vector<16x128xf32>
    %26 = arith.subf %23, %25 : vector<16x128xf32>
    %27 = arith.truncf %26 : vector<16x128xf32> to vector<16x128xbf16>
    %28 = tpu.concatenate %24, %27 in 1 : vector<16x128xbf16>, vector<16x128xbf16> -> vector<16x256xbf16>
    %cst_9 = arith.constant dense<0.000000e+00> : vector<16x128xf32>
    %29 = tpu.matmul %28, %5, %cst_9 {dimension_numbers = #tpu.dot_dimension_numbers<[1], [0], [0], [1], [0, 0, 1, 1], [], []>} : vector<16x256xbf16>, vector<256x128xbf16>, vector<16x128xf32> -> vector<16x128xf32>
    %30 = arith.maximumf %21, %29 : vector<16x128xf32>
    %c96_i32 = arith.constant 96 : i32
    %31 = tpu.dynamic_rotate %3 by %c96_i32 dim 1 : vector<16x128xf32>, i32 -> vector<16x128xf32>
    %32 = arith.mulf %2, %31 : vector<16x128xf32>
    %33 = arith.truncf %32 : vector<16x128xf32> to vector<16x128xbf16>
    %34 = arith.extf %33 : vector<16x128xbf16> to vector<16x128xf32>
    %35 = arith.subf %32, %34 : vector<16x128xf32>
    %36 = arith.truncf %35 : vector<16x128xf32> to vector<16x128xbf16>
    %37 = tpu.concatenate %33, %36 in 1 : vector<16x128xbf16>, vector<16x128xbf16> -> vector<16x256xbf16>
    %cst_10 = arith.constant dense<0.000000e+00> : vector<16x128xf32>
    %38 = tpu.matmul %37, %5, %cst_10 {dimension_numbers = #tpu.dot_dimension_numbers<[1], [0], [0], [1], [0, 0, 1, 1], [], []>} : vector<16x256xbf16>, vector<256x128xbf16>, vector<16x128xf32> -> vector<16x128xf32>
    %39 = arith.maximumf %30, %38 : vector<16x128xf32>
    %cst_11 = arith.constant 0.000000e+00 : f32
    %40 = vector.broadcast %cst_11 : f32 to vector<16x128xf32>
    %cst_12 = arith.constant 0.000000e+00 : f32
    %41 = vector.broadcast %cst_12 : f32 to vector<16x128xf32>
    %42 = arith.subf %12, %39 : vector<16x128xf32>
    %43 = math.exp %42 : vector<16x128xf32>
    %44 = arith.addf %40, %43 : vector<16x128xf32>
    %45 = arith.mulf %43, %4 : vector<16x128xf32>
    %46 = arith.addf %41, %45 : vector<16x128xf32>
    %47 = arith.subf %20, %39 : vector<16x128xf32>
    %48 = math.exp %47 : vector<16x128xf32>
    %49 = arith.addf %44, %48 : vector<16x128xf32>
    %c32_i32_13 = arith.constant 32 : i32
    %50 = tpu.dynamic_rotate %4 by %c32_i32_13 dim 1 : vector<16x128xf32>, i32 -> vector<16x128xf32>
    %51 = arith.mulf %48, %50 : vector<16x128xf32>
    %52 = arith.addf %46, %51 : vector<16x128xf32>
    %53 = arith.subf %29, %39 : vector<16x128xf32>
    %54 = math.exp %53 : vector<16x128xf32>
    %55 = arith.addf %49, %54 : vector<16x128xf32>
    %c64_i32_14 = arith.constant 64 : i32
    %56 = tpu.dynamic_rotate %4 by %c64_i32_14 dim 1 : vector<16x128xf32>, i32 -> vector<16x128xf32>
    %57 = arith.mulf %54, %56 : vector<16x128xf32>
    %58 = arith.addf %52, %57 : vector<16x128xf32>
    %59 = arith.subf %38, %39 : vector<16x128xf32>
    %60 = math.exp %59 : vector<16x128xf32>
    %61 = arith.addf %55, %60 : vector<16x128xf32>
    %c96_i32_15 = arith.constant 96 : i32
    %62 = tpu.dynamic_rotate %4 by %c96_i32_15 dim 1 : vector<16x128xf32>, i32 -> vector<16x128xf32>
    %63 = arith.mulf %60, %62 : vector<16x128xf32>
    %64 = arith.addf %58, %63 : vector<16x128xf32>
    %65 = tpu.reciprocal %61 {approx = true} : vector<16x128xf32> -> vector<16x128xf32>
    %66 = arith.mulf %61, %65 : vector<16x128xf32>
    %cst_16 = arith.constant 2.000000e+00 : f32
    %67 = vector.broadcast %cst_16 : f32 to vector<16x128xf32>
    %68 = arith.subf %67, %66 : vector<16x128xf32>
    %69 = arith.mulf %65, %68 : vector<16x128xf32>
    %70 = arith.mulf %64, %69 : vector<16x128xf32>
    %c0_17 = arith.constant 0 : index
    %c0_18 = arith.constant 0 : index
    %71 = vector.load %arg5[%c0_17, %c0_18] : memref<16x128xf32, #tpu.memory_space<vmem>>, vector<16x128xf32>
    tpu.vector_store %arg5[%c0_17, %c0_18], %70 {strides = array<i32>} : memref<16x128xf32, #tpu.memory_space<vmem>>, vector<16x128xf32>,
    return
  }
  func.func @transform_0(%arg0: i32) -> (i32, i32) {
    %c0_i32 = arith.constant 0 : i32
    %c0_i32_0 = arith.constant 0 : i32
    return %arg0, %c0_i32 : i32, i32
  }
  func.func @transform_1(%arg0: i32) -> (i32, i32) {
    %c0_i32 = arith.constant 0 : i32
    %c0_i32_0 = arith.constant 0 : i32
    return %arg0, %c0_i32 : i32, i32
  }
  func.func @transform_2(%arg0: i32) -> (i32, i32) {
    %c0_i32 = arith.constant 0 : i32
    %c0_i32_0 = arith.constant 0 : i32
    return %arg0, %c0_i32 : i32, i32
  }
  func.func @transform_3(%arg0: i32) -> (i32, i32) {
    %c0_i32 = arith.constant 0 : i32
    %c0_i32_0 = arith.constant 0 : i32
    %c0_i32_1 = arith.constant 0 : i32
    return %c0_i32, %c0_i32_0 : i32, i32
  }
  func.func @transform_4(%arg0: i32) -> (i32, i32) {
    %c0_i32 = arith.constant 0 : i32
    %c0_i32_0 = arith.constant 0 : i32
    return %arg0, %c0_i32 : i32, i32
  }
}

</mosaic_0001>

<llo_original>
// kernel: tpu_custom_call.1
$region0: #{tpu_custom_call.1}
  #allocation0 [shape = 'u32[]', space=smem, size = 0x4, offset = 0x4, fixed_abs, tag = 'smem constant byte address 0x4 - core index']
  #allocation1 [shape = 'u32[144,128]{1,0:T(1,128)}', space=vmem, size = 0x12000, scoped, tag = 'internal scratch']
  %s0 = inlined_call_operand.hbm [shape: f32[16,128], index: 0, kind: input, shape index: {}]
  %s1 = inlined_call_operand.hbm [shape: f32[16,128], index: 1, kind: input, shape index: {}]
  %s2 = inlined_call_operand.hbm [shape: f32[16,128], index: 2, kind: input, shape index: {}]
  %s3 = inlined_call_operand.hbm [shape: bf16[256,128], index: 3, kind: input, shape index: {}]
  %s4 = inlined_call_operand.hbm [shape: f32[16,128], index: 4, kind: output, shape index: {}]
  %s5 = sld [smem:[#allocation0]]
  $region42: #{tpu_custom_call.1} parent=0
    _
  %s7 = ssub.s32 1, %s5
  %s8 = scalar_select 0, %s7, %s5
  $region1: #{tpu_custom_call.1} parent=0
    #allocation2 [shape = 'u8[8192]{0}', space=vmem, size = 0x2000, scoped, tag = 'input window, operand 0, single buffered']
    #allocation3 [shape = 's32[1]{0}', space=sflag, size = 0x4, scoped, tag = 'scoped memory for tpu_custom_call.1']
    #allocation4 [shape = 's32[1]{0}', space=sflag, size = 0x4, scoped, tag = 'scoped memory for tpu_custom_call.1']
    #allocation5 [shape = 'u8[8192]{0}', space=vmem, size = 0x2000, scoped, tag = 'input window, operand 1, single buffered']
    #allocation6 [shape = 's32[1]{0}', space=sflag, size = 0x4, scoped, tag = 'scoped memory for tpu_custom_call.1']
    #allocation7 [shape = 'u8[8192]{0}', space=vmem, size = 0x2000, scoped, tag = 'input window, operand 2, single buffered']
    #allocation8 [shape = 'u8[65536]{0}', space=vmem, size = 0x10000, scoped, tag = 'input window, operand 3, single buffered']
    #allocation9 [shape = 's32[1]{0}', space=sflag, size = 0x4, scoped, tag = 'scoped memory for tpu_custom_call.1']
    #allocation10 [shape = 'u8[8192]{0}', space=vmem, size = 0x2000, scoped, tag = 'output window, operand 0, single buffered']
    %9 = vsyncpa [#allocation3], 0
    %10 = vsyncpa [#allocation6], 0
    %11 = vsyncpa [#allocation9], 0
    %12 = vsyncpa [#allocation4], 0
    // Predicated region
    $region2: #{tpu_custom_call.1} parent=1 // pred_check
      _
    $region3: #{tpu_custom_call.1} parent=1 // pred_check_branch
      %14 = sbr.rel (0) target = $region5
    $region4: #{tpu_custom_call.1} parent=1 // pred_region
      %s16 = ssub.s32 256, 256
      %17 = vsyncadd [#allocation3], %s16
      %s18 = sshll.u32 [#allocation2], 4
      %s19 = int_to_ptr.vmem [resolvable:$true] %s18
      %24 = dma.hbm_to_vmem [thread:$0]  %s0, 256, %s19, [#allocation3], 128, 128, 8
    $region5: #{tpu_custom_call.1} parent=1 // pred_fallthru
      _
    // Predicated region
    $region6: #{tpu_custom_call.1} parent=1 // pred_check
      _
    $region7: #{tpu_custom_call.1} parent=1 // pred_check_branch
      %26 = sbr.rel (0) target = $region9
    $region8: #{tpu_custom_call.1} parent=1 // pred_region
      %s28 = ssub.s32 256, 256
      %29 = vsyncadd [#allocation6], %s28
      %s30 = sshll.u32 [#allocation5], 4
      %s31 = int_to_ptr.vmem [resolvable:$true] %s30
      %36 = dma.hbm_to_vmem [thread:$0]  %s1, 256, %s31, [#allocation6], 128, 128, 8
    $region9: #{tpu_custom_call.1} parent=1 // pred_fallthru
      _
    // Predicated region
    $region10: #{tpu_custom_call.1} parent=1 // pred_check
      _
    $region11: #{tpu_custom_call.1} parent=1 // pred_check_branch
      %38 = sbr.rel (0) target = $region13
    $region12: #{tpu_custom_call.1} parent=1 // pred_region
      %s40 = ssub.s32 256, 256
      %41 = vsyncadd [#allocation6], %s40
      %s42 = sshll.u32 [#allocation7], 4
      %s43 = int_to_ptr.vmem [resolvable:$true] %s42
      %48 = dma.hbm_to_vmem [thread:$0]  %s2, 256, %s43, [#allocation6], 128, 128, 8
    $region13: #{tpu_custom_call.1} parent=1 // pred_fallthru
      _
    // Predicated region
    $region14: #{tpu_custom_call.1} parent=1 // pred_check
      _
    $region15: #{tpu_custom_call.1} parent=1 // pred_check_branch
      %50 = sbr.rel (0) target = $region17
    $region16: #{tpu_custom_call.1} parent=1 // pred_region
      %s52 = ssub.s32 2048, 2048
      %53 = vsyncadd [#allocation9], %s52
      %s54 = sshll.u32 [#allocation8], 4
      %s55 = int_to_ptr.vmem [resolvable:$true] %s54
      %60 = dma.hbm_to_vmem [thread:$0]  %s3, 2048, %s55, [#allocation9], 64, 64, 4
    $region17: #{tpu_custom_call.1} parent=1 // pred_fallthru
      _
    // Predicated region
    $region18: #{tpu_custom_call.1} parent=1 // pred_check
      _
    $region19: #{tpu_custom_call.1} parent=1 // pred_check_branch
      %62 = sbr.rel (0) target = $region21
    $region20: #{tpu_custom_call.1} parent=1 // pred_region
      %63 = dma.done [#allocation3], 256
    $region21: #{tpu_custom_call.1} parent=1 // pred_fallthru
      _
    // Predicated region
    $region22: #{tpu_custom_call.1} parent=1 // pred_check
      _
    $region23: #{tpu_custom_call.1} parent=1 // pred_check_branch
      %65 = sbr.rel (0) target = $region25
    $region24: #{tpu_custom_call.1} parent=1 // pred_region
      %66 = dma.done [#allocation6], 256
    $region25: #{tpu_custom_call.1} parent=1 // pred_fallthru
      _
    // Predicated region
    $region26: #{tpu_custom_call.1} parent=1 // pred_check
      _
    $region27: #{tpu_custom_call.1} parent=1 // pred_check_branch
      %68 = sbr.rel (0) target = $region29
    $region28: #{tpu_custom_call.1} parent=1 // pred_region
      %69 = dma.done [#allocation6], 256
    $region29: #{tpu_custom_call.1} parent=1 // pred_fallthru
      _
    // Predicated region
    $region30: #{tpu_custom_call.1} parent=1 // pred_check
      _
    $region31: #{tpu_custom_call.1} parent=1 // pred_check_branch
      %71 = sbr.rel (0) target = $region33
    $region32: #{tpu_custom_call.1} parent=1 // pred_region
      %72 = dma.done [#allocation9], 2048
    $region33: #{tpu_custom_call.1} parent=1 // pred_fallthru
      _
    %v74 = vld [vmem:[#allocation2] sm:$0xff]
    %v75 = vld [vmem:[#allocation2 + $0x8] sm:$0xff]
    %v76 = vmul.f32 %v74, 0.17677669
    %v77 = vmul.f32 %v75, 0.17677669
    %v78 = vld [vmem:[#allocation5] sm:$0xff]
    %v79 = vld [vmem:[#allocation5 + $0x8] sm:$0xff]
    %v80 = vld [vmem:[#allocation7] sm:$0xff]
    %v81 = vld [vmem:[#allocation7 + $0x8] sm:$0xff]
    %v82 = vld [vmem:[#allocation8] sm:$0xf]
    %v83 = vld [vmem:[#allocation8 + $0x4] sm:$0xf]
    %v84 = vld [vmem:[#allocation8 + $0x8] sm:$0xf]
    %v85 = vld [vmem:[#allocation8 + $0xc] sm:$0xf]
    %v86 = vld [vmem:[#allocation8 + $0x10] sm:$0xf]
    %v87 = vld [vmem:[#allocation8 + $0x14] sm:$0xf]
    %v88 = vld [vmem:[#allocation8 + $0x18] sm:$0xf]
    %v89 = vld [vmem:[#allocation8 + $0x1c] sm:$0xf]
    %v90 = vld [vmem:[#allocation8 + $0x20] sm:$0xf]
    %v91 = vld [vmem:[#allocation8 + $0x24] sm:$0xf]
    %v92 = vld [vmem:[#allocation8 + $0x28] sm:$0xf]
    %v93 = vld [vmem:[#allocation8 + $0x2c] sm:$0xf]
    %v94 = vld [vmem:[#allocation8 + $0x30] sm:$0xf]
    %v95 = vld [vmem:[#allocation8 + $0x34] sm:$0xf]
    %v96 = vld [vmem:[#allocation8 + $0x38] sm:$0xf]
    %v97 = vld [vmem:[#allocation8 + $0x3c] sm:$0xf]
    %v98 = vld [vmem:[#allocation8 + $0x40] sm:$0xf]
    %v99 = vld [vmem:[#allocation8 + $0x44] sm:$0xf]
    %v100 = vld [vmem:[#allocation8 + $0x48] sm:$0xf]
    %v101 = vld [vmem:[#allocation8 + $0x4c] sm:$0xf]
    %v102 = vld [vmem:[#allocation8 + $0x50] sm:$0xf]
    %v103 = vld [vmem:[#allocation8 + $0x54] sm:$0xf]
    %v104 = vld [vmem:[#allocation8 + $0x58] sm:$0xf]
    %v105 = vld [vmem:[#allocation8 + $0x5c] sm:$0xf]
    %v106 = vld [vmem:[#allocation8 + $0x60] sm:$0xf]
    %v107 = vld [vmem:[#allocation8 + $0x64] sm:$0xf]
    %v108 = vld [vmem:[#allocation8 + $0x68] sm:$0xf]
    %v109 = vld [vmem:[#allocation8 + $0x6c] sm:$0xf]
    %v110 = vld [vmem:[#allocation8 + $0x70] sm:$0xf]
    %v111 = vld [vmem:[#allocation8 + $0x74] sm:$0xf]
    %v112 = vld [vmem:[#allocation8 + $0x78] sm:$0xf]
    %v113 = vld [vmem:[#allocation8 + $0x7c] sm:$0xf]
    %v114 = vmul.f32 %v76, %v78
    %v115 = vmul.f32 %v77, %v79
    %v116 = vpack.c.bf16 %v115, %v114
    %v117 = vunpack.c.l.bf16 %v116
    %v118 = vunpack.c.h.bf16 %v116
    %v119 = vsub.f32 %v114, %v117
    %v120 = vsub.f32 %v115, %v118
    %v121 = vpack.c.bf16 %v120, %v119
    %v154 = vunpack.c.l.b16 %v82
    %v155 = vunpack.c.l.b16 %v83
    %v156 = vunpack.c.l.b16 %v84
    %v157 = vunpack.c.l.b16 %v85
    %v158 = vunpack.c.l.b16 %v86
    %v159 = vunpack.c.l.b16 %v87
    %v160 = vunpack.c.l.b16 %v88
    %v161 = vunpack.c.l.b16 %v89
    %v162 = vunpack.c.l.b16 %v90
    %v163 = vunpack.c.l.b16 %v91
    %v164 = vunpack.c.l.b16 %v92
    %v165 = vunpack.c.l.b16 %v93
    %v166 = vunpack.c.l.b16 %v94
    %v167 = vunpack.c.l.b16 %v95
    %v168 = vunpack.c.l.b16 %v96
    %v169 = vunpack.c.l.b16 %v97
    %v170 = vunpack.c.l.b16 %v98
    %v171 = vunpack.c.l.b16 %v99
    %v172 = vunpack.c.l.b16 %v100
    %v173 = vunpack.c.l.b16 %v101
    %v174 = vunpack.c.l.b16 %v102
    %v175 = vunpack.c.l.b16 %v103
    %v176 = vunpack.c.l.b16 %v104
    %v177 = vunpack.c.l.b16 %v105
    %v178 = vunpack.c.l.b16 %v106
    %v179 = vunpack.c.l.b16 %v107
    %v180 = vunpack.c.l.b16 %v108
    %v181 = vunpack.c.l.b16 %v109
    %v182 = vunpack.c.l.b16 %v110
    %v183 = vunpack.c.l.b16 %v111
    %v184 = vunpack.c.l.b16 %v112
    %v185 = vunpack.c.l.b16 %v113
    %v186 = vpack.c.b16 %v155, %v154
    %v187 = vpack.c.b16 %v157, %v156
    %v188 = vpack.c.b16 %v159, %v158
    %v189 = vpack.c.b16 %v161, %v160
    %v190 = vpack.c.b16 %v163, %v162
    %v191 = vpack.c.b16 %v165, %v164
    %v192 = vpack.c.b16 %v167, %v166
    %v193 = vpack.c.b16 %v169, %v168
    %v194 = vpack.c.b16 %v171, %v170
    %v195 = vpack.c.b16 %v173, %v172
    %v196 = vpack.c.b16 %v175, %v174
    %v197 = vpack.c.b16 %v177, %v176
    %v198 = vpack.c.b16 %v179, %v178
    %v199 = vpack.c.b16 %v181, %v180
    %v200 = vpack.c.b16 %v183, %v182
    %v201 = vpack.c.b16 %v185, %v184
    %218 = vmatprep.subr.bf16.mxu0 0
    %219 = vmatpush1.bf16.msra.mxu0 %v186
    %220 = vmatprep.subr.bf16.mxu0 0
    %221 = vmatpush1.bf16.msra.mxu0 %v187
    %222 = vmatprep.subr.bf16.mxu0 0
    %223 = vmatpush1.bf16.msra.mxu0 %v188
    %224 = vmatprep.subr.bf16.mxu0 0
    %225 = vmatpush1.bf16.msra.mxu0 %v189
    %226 = vmatprep.subr.bf16.mxu0 0
    %227 = vmatpush1.bf16.msra.mxu0 %v190
    %228 = vmatprep.subr.bf16.mxu0 0
    %229 = vmatpush1.bf16.msra.mxu0 %v191
    %230 = vmatprep.subr.bf16.mxu0 0
    %231 = vmatpush1.bf16.msra.mxu0 %v192
    %232 = vmatprep.subr.bf16.mxu0 0
    %233 = vmatpush1.bf16.msra.mxu0 %v193
    %234 = vmatprep.subr.bf16.mxu0 0
    %235 = vmatpush1.bf16.msra.mxu0 %v194
    %236 = vmatprep.subr.bf16.mxu0 0
    %237 = vmatpush1.bf16.msra.mxu0 %v195
    %238 = vmatprep.subr.bf16.mxu0 0
    %239 = vmatpush1.bf16.msra.mxu0 %v196
    %240 = vmatprep.subr.bf16.mxu0 0
    %241 = vmatpush1.bf16.msra.mxu0 %v197
    %242 = vmatprep.subr.bf16.mxu0 0
    %243 = vmatpush1.bf16.msra.mxu0 %v198
    %244 = vmatprep.subr.bf16.mxu0 0
    %245 = vmatpush1.bf16.msra.mxu0 %v199
    %246 = vmatprep.subr.bf16.mxu0 0
    %247 = vmatpush1.bf16.msra.mxu0 %v200
    %248 = vmatprep.subr.bf16.mxu0 0
    %249 = vmatpush1.bf16.msra.mxu0 %v201
    %250 = vmatprep.mubr.bf16.mxu0 %v121
    %251 = vmatmul.mubr.bf16.gmra.mrb[0].mxu0 %v116
    %v252 = vpop.f32.mrb[0].mxu0
    %v253 = vadd.f32 0.0, %v252
    %v254 = vpop.f32.mrb[0].mxu0
    %v255 = vpop.f32.mrb[0].mxu0
    %v256 = vadd.f32 0.0, %v255
    %v257 = vpop.f32.mrb[0].mxu0
    %258 = vdwg.mxu0
    %259 = vrot.lane.b32.xlu0 %v78, 32
    %v260 = vpop.permute.xlu0 %259
    %261 = vrot.lane.b32.xlu0 %v79, 32
    %v262 = vpop.permute.xlu0 %261
    %v263 = vmul.f32 %v76, %v260
    %v264 = vmul.f32 %v77, %v262
    %v265 = vpack.c.bf16 %v264, %v263
    %v266 = vunpack.c.l.bf16 %v265
    %v267 = vunpack.c.h.bf16 %v265
    %v268 = vsub.f32 %v263, %v266
    %v269 = vsub.f32 %v264, %v267
    %v270 = vpack.c.bf16 %v269, %v268
    %271 = vmatprep.subr.bf16.mxu0 0
    %272 = vmatpush1.bf16.msra.mxu0 %v186
    %273 = vmatprep.subr.bf16.mxu0 0
    %274 = vmatpush1.bf16.msra.mxu0 %v187
    %275 = vmatprep.subr.bf16.mxu0 0
    %276 = vmatpush1.bf16.msra.mxu0 %v188
    %277 = vmatprep.subr.bf16.mxu0 0
    %278 = vmatpush1.bf16.msra.mxu0 %v189
    %279 = vmatprep.subr.bf16.mxu0 0
    %280 = vmatpush1.bf16.msra.mxu0 %v190
    %281 = vmatprep.subr.bf16.mxu0 0
    %282 = vmatpush1.bf16.msra.mxu0 %v191
    %283 = vmatprep.subr.bf16.mxu0 0
    %284 = vmatpush1.bf16.msra.mxu0 %v192
    %285 = vmatprep.subr.bf16.mxu0 0
    %286 = vmatpush1.bf16.msra.mxu0 %v193
    %287 = vmatprep.subr.bf16.mxu0 0
    %288 = vmatpush1.bf16.msra.mxu0 %v194
    %289 = vmatprep.subr.bf16.mxu0 0
    %290 = vmatpush1.bf16.msra.mxu0 %v195
    %291 = vmatprep.subr.bf16.mxu0 0
    %292 = vmatpush1.bf16.msra.mxu0 %v196
    %293 = vmatprep.subr.bf16.mxu0 0
    %294 = vmatpush1.bf16.msra.mxu0 %v197
    %295 = vmatprep.subr.bf16.mxu0 0
    %296 = vmatpush1.bf16.msra.mxu0 %v198
    %297 = vmatprep.subr.bf16.mxu0 0
    %298 = vmatpush1.bf16.msra.mxu0 %v199
    %299 = vmatprep.subr.bf16.mxu0 0
    %300 = vmatpush1.bf16.msra.mxu0 %v200
    %301 = vmatprep.subr.bf16.mxu0 0
    %302 = vmatpush1.bf16.msra.mxu0 %v201
    %303 = vmatprep.mubr.bf16.mxu0 %v270
    %304 = vmatmul.mubr.bf16.gmra.mrb[0].mxu0 %v265
    %v305 = vpop.f32.mrb[0].mxu0
    %v306 = vadd.f32 0.0, %v305
    %v307 = vpop.f32.mrb[0].mxu0
    %v308 = vpop.f32.mrb[0].mxu0
    %v309 = vadd.f32 0.0, %v308
    %v310 = vpop.f32.mrb[0].mxu0
    %311 = vdwg.mxu0
    %v312 = vmax.f32 %v253, %v306
    %v313 = vmax.f32 %v256, %v309
    %314 = vrot.lane.b32.xlu0 %v78, 64
    %v315 = vpop.permute.xlu0 %314
    %316 = vrot.lane.b32.xlu0 %v79, 64
    %v317 = vpop.permute.xlu0 %316
    %v318 = vmul.f32 %v76, %v315
    %v319 = vmul.f32 %v77, %v317
    %v320 = vpack.c.bf16 %v319, %v318
    %v321 = vunpack.c.l.bf16 %v320
    %v322 = vunpack.c.h.bf16 %v320
    %v323 = vsub.f32 %v318, %v321
    %v324 = vsub.f32 %v319, %v322
    %v325 = vpack.c.bf16 %v324, %v323
    %326 = vmatprep.subr.bf16.mxu0 0
    %327 = vmatpush1.bf16.msra.mxu0 %v186
    %328 = vmatprep.subr.bf16.mxu0 0
    %329 = vmatpush1.bf16.msra.mxu0 %v187
    %330 = vmatprep.subr.bf16.mxu0 0
    %331 = vmatpush1.bf16.msra.mxu0 %v188
    %332 = vmatprep.subr.bf16.mxu0 0
    %333 = vmatpush1.bf16.msra.mxu0 %v189
    %334 = vmatprep.subr.bf16.mxu0 0
    %335 = vmatpush1.bf16.msra.mxu0 %v190
    %336 = vmatprep.subr.bf16.mxu0 0
    %337 = vmatpush1.bf16.msra.mxu0 %v191
    %338 = vmatprep.subr.bf16.mxu0 0
    %339 = vmatpush1.bf16.msra.mxu0 %v192
    %340 = vmatprep.subr.bf16.mxu0 0
    %341 = vmatpush1.bf16.msra.mxu0 %v193
    %342 = vmatprep.subr.bf16.mxu0 0
    %343 = vmatpush1.bf16.msra.mxu0 %v194
    %344 = vmatprep.subr.bf16.mxu0 0
    %345 = vmatpush1.bf16.msra.mxu0 %v195
    %346 = vmatprep.subr.bf16.mxu0 0
    %347 = vmatpush1.bf16.msra.mxu0 %v196
    %348 = vmatprep.subr.bf16.mxu0 0
    %349 = vmatpush1.bf16.msra.mxu0 %v197
    %350 = vmatprep.subr.bf16.mxu0 0
    %351 = vmatpush1.bf16.msra.mxu0 %v198
    %352 = vmatprep.subr.bf16.mxu0 0
    %353 = vmatpush1.bf16.msra.mxu0 %v199
    %354 = vmatprep.subr.bf16.mxu0 0
    %355 = vmatpush1.bf16.msra.mxu0 %v200
    %356 = vmatprep.subr.bf16.mxu0 0
    %357 = vmatpush1.bf16.msra.mxu0 %v201
    %358 = vmatprep.mubr.bf16.mxu0 %v325
    %359 = vmatmul.mubr.bf16.gmra.mrb[0].mxu0 %v320
    %v360 = vpop.f32.mrb[0].mxu0
    %v361 = vadd.f32 0.0, %v360
    %v362 = vpop.f32.mrb[0].mxu0
    %v363 = vpop.f32.mrb[0].mxu0
    %v364 = vadd.f32 0.0, %v363
    %v365 = vpop.f32.mrb[0].mxu0
    %366 = vdwg.mxu0
    %v367 = vmax.f32 %v312, %v361
    %v368 = vmax.f32 %v313, %v364
    %369 = vrot.lane.b32.xlu0 %v78, 96
    %v370 = vpop.permute.xlu0 %369
    %371 = vrot.lane.b32.xlu0 %v79, 96
    %v372 = vpop.permute.xlu0 %371
    %v373 = vmul.f32 %v76, %v370
    %v374 = vmul.f32 %v77, %v372
    %v375 = vpack.c.bf16 %v374, %v373
    %v376 = vunpack.c.l.bf16 %v375
    %v377 = vunpack.c.h.bf16 %v375
    %v378 = vsub.f32 %v373, %v376
    %v379 = vsub.f32 %v374, %v377
    %v380 = vpack.c.bf16 %v379, %v378
    %381 = vmatprep.subr.bf16.mxu0 0
    %382 = vmatpush1.bf16.msra.mxu0 %v186
    %383 = vmatprep.subr.bf16.mxu0 0
    %384 = vmatpush1.bf16.msra.mxu0 %v187
    %385 = vmatprep.subr.bf16.mxu0 0
    %386 = vmatpush1.bf16.msra.mxu0 %v188
    %387 = vmatprep.subr.bf16.mxu0 0
    %388 = vmatpush1.bf16.msra.mxu0 %v189
    %389 = vmatprep.subr.bf16.mxu0 0
    %390 = vmatpush1.bf16.msra.mxu0 %v190
    %391 = vmatprep.subr.bf16.mxu0 0
    %392 = vmatpush1.bf16.msra.mxu0 %v191
    %393 = vmatprep.subr.bf16.mxu0 0
    %394 = vmatpush1.bf16.msra.mxu0 %v192
    %395 = vmatprep.subr.bf16.mxu0 0
    %396 = vmatpush1.bf16.msra.mxu0 %v193
    %397 = vmatprep.subr.bf16.mxu0 0
    %398 = vmatpush1.bf16.msra.mxu0 %v194
    %399 = vmatprep.subr.bf16.mxu0 0
    %400 = vmatpush1.bf16.msra.mxu0 %v195
    %401 = vmatprep.subr.bf16.mxu0 0
    %402 = vmatpush1.bf16.msra.mxu0 %v196
    %403 = vmatprep.subr.bf16.mxu0 0
    %404 = vmatpush1.bf16.msra.mxu0 %v197
    %405 = vmatprep.subr.bf16.mxu0 0
    %406 = vmatpush1.bf16.msra.mxu0 %v198
    %407 = vmatprep.subr.bf16.mxu0 0
    %408 = vmatpush1.bf16.msra.mxu0 %v199
    %409 = vmatprep.subr.bf16.mxu0 0
    %410 = vmatpush1.bf16.msra.mxu0 %v200
    %411 = vmatprep.subr.bf16.mxu0 0
    %412 = vmatpush1.bf16.msra.mxu0 %v201
    %413 = vmatprep.mubr.bf16.mxu0 %v380
    %414 = vmatmul.mubr.bf16.gmra.mrb[0].mxu0 %v375
    %v415 = vpop.f32.mrb[0].mxu0
    %v416 = vadd.f32 0.0, %v415
    %v417 = vpop.f32.mrb[0].mxu0
    %v418 = vpop.f32.mrb[0].mxu0
    %v419 = vadd.f32 0.0, %v418
    %v420 = vpop.f32.mrb[0].mxu0
    %421 = vdwg.mxu0
    %v422 = vmax.f32 %v367, %v416
    %v423 = vmax.f32 %v368, %v419
    %v424 = vsub.f32 %v253, %v422
    %v425 = vsub.f32 %v256, %v423
    %v426 = vmul.f32 %v424, 1.442695
    %v427 = vpow.pop %v426
    %v428 = vmul.f32 %v425, 1.442695
    %v429 = vpow.pop %v428
    %v430 = vadd.f32 %v427, 0.0
    %v431 = vadd.f32 %v429, 0.0
    %v432 = vmul.f32 %v427, %v80
    %v433 = vmul.f32 %v429, %v81
    %v434 = vadd.f32 %v432, 0.0
    %v435 = vadd.f32 %v433, 0.0
    %v436 = vsub.f32 %v306, %v422
    %v437 = vsub.f32 %v309, %v423
    %v438 = vmul.f32 %v436, 1.442695
    %v439 = vpow.pop %v438
    %v440 = vmul.f32 %v437, 1.442695
    %v441 = vpow.pop %v440
    %v442 = vadd.f32 %v430, %v439
    %v443 = vadd.f32 %v431, %v441
    %444 = vrot.lane.b32.xlu0 %v80, 32
    %v445 = vpop.permute.xlu0 %444
    %446 = vrot.lane.b32.xlu0 %v81, 32
    %v447 = vpop.permute.xlu0 %446
    %v448 = vmul.f32 %v439, %v445
    %v449 = vmul.f32 %v441, %v447
    %v450 = vadd.f32 %v434, %v448
    %v451 = vadd.f32 %v435, %v449
    %v452 = vsub.f32 %v361, %v422
    %v453 = vsub.f32 %v364, %v423
    %v454 = vmul.f32 %v452, 1.442695
    %v455 = vpow.pop %v454
    %v456 = vmul.f32 %v453, 1.442695
    %v457 = vpow.pop %v456
    %v458 = vadd.f32 %v442, %v455
    %v459 = vadd.f32 %v443, %v457
    %460 = vrot.lane.b32.xlu0 %v80, 64
    %v461 = vpop.permute.xlu0 %460
    %462 = vrot.lane.b32.xlu0 %v81, 64
    %v463 = vpop.permute.xlu0 %462
    %v464 = vmul.f32 %v455, %v461
    %v465 = vmul.f32 %v457, %v463
    %v466 = vadd.f32 %v450, %v464
    %v467 = vadd.f32 %v451, %v465
    %v468 = vsub.f32 %v416, %v422
    %v469 = vsub.f32 %v419, %v423
    %v470 = vmul.f32 %v468, 1.442695
    %v471 = vpow.pop %v470
    %v472 = vmul.f32 %v469, 1.442695
    %v473 = vpow.pop %v472
    %v474 = vadd.f32 %v458, %v471
    %v475 = vadd.f32 %v459, %v473
    %476 = vrot.lane.b32.xlu0 %v80, 96
    %v477 = vpop.permute.xlu0 %476
    %478 = vrot.lane.b32.xlu0 %v81, 96
    %v479 = vpop.permute.xlu0 %478
    %v480 = vmul.f32 %v471, %v477
    %v481 = vmul.f32 %v473, %v479
    %v482 = vadd.f32 %v466, %v480
    %v483 = vadd.f32 %v467, %v481
    %v484 = vrcp.pop %v474
    %v485 = vrcp.pop %v475
    %v486 = vmul.f32 %v474, %v484
    %v487 = vmul.f32 %v475, %v485
    %v488 = vsub.f32 2.0, %v486
    %v489 = vsub.f32 2.0, %v487
    %v490 = vmul.f32 %v484, %v488
    %v491 = vmul.f32 %v485, %v489
    %v492 = vmul.f32 %v482, %v490
    %v493 = vmul.f32 %v483, %v491
    %494 = vst [vmem:[#allocation10] sm:$0xff] %v492
    %495 = vst [vmem:[#allocation10 + $0x8] sm:$0xff] %v493
    // Predicated region
    $region34: #{tpu_custom_call.1} parent=1 // pred_check
      _
    $region35: #{tpu_custom_call.1} parent=1 // pred_check_branch
      %497 = sbr.rel (0) target = $region37
    $region36: #{tpu_custom_call.1} parent=1 // pred_region
      %s499 = ssub.s32 256, 256
      %500 = vsyncadd [#allocation4], %s499
      %s501 = sshll.u32 [#allocation10], 4
      %s502 = int_to_ptr.vmem [resolvable:$true] %s501
      %507 = dma.vmem_to_hbm [thread:$0]  %s502, 256, %s4, [#allocation4], 128, 128, 8
    $region37: #{tpu_custom_call.1} parent=1 // pred_fallthru
      _
    // Predicated region
    $region38: #{tpu_custom_call.1} parent=1 // pred_check
      _
    $region39: #{tpu_custom_call.1} parent=1 // pred_check_branch
      %509 = sbr.rel (0) target = $region41
    $region40: #{tpu_custom_call.1} parent=1 // pred_region
      %510 = dma.done [#allocation4], 256
    $region41: #{tpu_custom_call.1} parent=1 // pred_fallthru
      _
    %511 = vsyncpa [#allocation3], 1
    %512 = vsyncpa [#allocation6], 1
    %513 = vsyncpa [#allocation9], 1
    %514 = vsyncpa [#allocation4], 1

</llo_original>
